<compile_context>
chip_gen: v5e
topology: v5e:2x2
jax: 0.10.0
libtpu: 0.0.40
codegen_flags: <defaults>
</compile_context>

<pallas_src>
import functools

import jax
import jax.numpy as jnp
from jax.experimental import pallas as pl
from jax.experimental.pallas import tpu as pltpu

LEAKY_SLOPE = 0.2
BN_EPS = 1e-5
LANE = 128


def _round_up(n, m=LANE):
    return ((n + m - 1) // m) * m


def _vmem_capacity_bytes():
    """Generation-aware VMEM capacity (v5e/v6e: 128 MiB, v7x: 64 MiB per TC)."""
    try:
        cap = int(getattr(pltpu.get_tpu_info(), "vmem_capacity_bytes", 0))
        if cap > 0:
            return cap
    except Exception:
        pass
    return 64 * 1024 * 1024  # conservative fallback (v7x per-TC)


# ---------------------------------------------------------------------------
# Single fused kernel: whole MLP in one VMEM-resident pass
# ---------------------------------------------------------------------------
def _mlp_kernel(n_hidden, *refs):
    """refs = (x, [w, gamma, beta] * n_hidden, w_out, b_out, out)."""
    x_ref = refs[0]
    out_ref = refs[-1]

    # Cast to the MXU input dtype once, inside VMEM (no wrapper-side HBM pass).
    h = x_ref[...].astype(jnp.bfloat16)                    # (B, D0) bf16
    idx = 1
    for _ in range(n_hidden):
        w_ref, g_ref, be_ref = refs[idx], refs[idx + 1], refs[idx + 2]
        idx += 3

        # Linear on the MXU, f32 accumulation.  Hidden-layer bias is NOT
        # applied: BatchNorm's batch-mean subtraction cancels it exactly.
        y = jnp.dot(h, w_ref[...], preferred_element_type=jnp.float32)

        # BatchNorm1d (training-mode batch stats), two-pass moments folded
        # into a per-column scale (gamma * rsqrt(var+eps)) + shift epilogue.
        mean = jnp.mean(y, axis=0, keepdims=True)          # (1, D)
        centered = y - mean                                # (B, D)
        var = jnp.mean(centered * centered, axis=0, keepdims=True)
        scale = g_ref[...] * jax.lax.rsqrt(var + BN_EPS)   # (1, D)
        z = centered * scale + be_ref[...]                 # 2 full-size VPU ops

        # LeakyReLU(0.2) == max(z, 0.2*z) (valid: slope < 1).
        # Dropout(0.4) = identity (eval mode).
        a = jnp.maximum(z, LEAKY_SLOPE * z)

        # Carry bf16 activations between layers (halves live VMEM footprint);
        # the epilogue math above stays f32 (important on v5e: no bf16 VPU).
        h = a.astype(jnp.bfloat16)

    # Output Linear: lane-dense 128-padded result -> unmasked vector stores.
    w_ref, b_ref = refs[idx], refs[idx + 1]
    out_ref[...] = (jnp.dot(h, w_ref[...], preferred_element_type=jnp.float32)
                    + b_ref[...])


def _vmem_spec():
    return pl.BlockSpec(memory_space=pltpu.MemorySpace.VMEM)


def _flatten_params(params):
    flat = []
    for layer in params[:-1]:
        flat += [layer["w"], layer["gamma"], layer["beta"]]
    flat += [params[-1]["w"], params[-1]["b"]]
    return flat


# ---------------------------------------------------------------------------
# Forward pass (mirrors FullyConnectedNetwork.forward)
# ---------------------------------------------------------------------------
@functools.partial(jax.jit, static_argnames=("size_out",))
def fully_connected_forward(x, params, *, size_out):
    batch = x.shape[0]
    # X.view(X.shape[0], -1): metadata-only reshape for a contiguous array —
    # no extra HBM pass (no pad, no cast; the bf16 cast happens in-kernel).
    h = x.reshape(batch, -1)
    if h.dtype != jnp.float32:
        h = h.astype(jnp.float32)

    flat = _flatten_params(params)
    d_out_pad = params[-1]["w"].shape[1]
    n_hidden = len(params) - 1

    # Footprint guard for the fully-fused single-program path.  Budget is
    # derived from the actual chip generation; keep >=50% margin for the
    # double-buffered-free single-shot DMAs and compiler-internal scratch.
    vmem_cap = _vmem_capacity_bytes()
    max_w = max(p["w"].shape[1] for p in params)
    footprint = h.size * 4                                      # input slab (f32)
    footprint += sum(p.size * p.dtype.itemsize for p in flat)   # weights / BN
    footprint += batch * d_out_pad * 4                          # output slab
    footprint += batch * max_w * (4 + 4 + 2 + 2)                # live y/z + bf16 h + cast tmp
    assert footprint < vmem_cap // 2, (
        "activations/weights exceed VMEM budget; batch-tiled BN path needed")

    out_padded = pl.pallas_call(
        functools.partial(_mlp_kernel, n_hidden),
        out_shape=jax.ShapeDtypeStruct((batch, d_out_pad), jnp.float32),
        in_specs=[_vmem_spec()] * (1 + len(flat)),
        out_specs=_vmem_spec(),
        compiler_params=pltpu.CompilerParams(
            vmem_limit_bytes=int(vmem_cap * 3 // 4)),
    )(h, *flat)

    return out_padded[:, :size_out]


# ---------------------------------------------------------------------------
# Parameter construction (PyTorch-like init; only output/lane dims 128-padded,
# layer-0 K kept raw; weights stored transposed (d_in, d_out) in bf16)
# ---------------------------------------------------------------------------
def init_params(key, fc, size_out):
    """Returns (padded_params for the kernel, raw_params for the f32 reference)."""
    dims = list(fc) + [size_out]
    padded, raw = [], []
    for i in range(len(dims) - 1):
        d_in, d_out = dims[i], dims[i + 1]
        d_out_p = _round_up(d_out)
        # Layer 0 keeps the raw K (input is not lane-padded).  Later layers
        # receive an activation already padded to the previous layer's d_out_p,
        # so their K must match (padded rows are zero and thus inert).
        d_in_k = d_in if i == 0 else _round_up(d_in)

        key, k_w, k_b = jax.random.split(key, 3)
        bound = 1.0 / float(d_in) ** 0.5
        w = jax.random.uniform(k_w, (d_in, d_out), jnp.float32, -bound, bound)
        b = jax.random.uniform(k_b, (1, d_out), jnp.float32, -bound, bound)

        w_p = (jnp.zeros((d_in_k, d_out_p), jnp.float32)
               .at[:d_in, :d_out].set(w).astype(jnp.bfloat16))

        is_hidden = i < len(fc) - 1
        if is_hidden:
            gamma = jnp.ones((1, d_out), jnp.float32)
            beta = jnp.zeros((1, d_out), jnp.float32)
            gamma_p = jnp.zeros((1, d_out_p), jnp.float32).at[:, :d_out].set(gamma)
            beta_p = jnp.zeros((1, d_out_p), jnp.float32).at[:, :d_out].set(beta)
            # Hidden Linear bias is NOT shipped to the kernel: BatchNorm's
            # batch-mean subtraction cancels it exactly.
            padded.append(dict(w=w_p, gamma=gamma_p, beta=beta_p))
            raw.append(dict(w=w, b=b, gamma=gamma, beta=beta))
        else:
            b_p = jnp.zeros((1, d_out_p), jnp.float32).at[:, :d_out].set(b)
            padded.append(dict(w=w_p, b=b_p))
            raw.append(dict(w=w, b=b))
    return padded, raw


# ---------------------------------------------------------------------------
# Pure-JAX references
# ---------------------------------------------------------------------------
def reference_forward_kernel_math(x, params, size_out):
    """Same math as the kernel (padded params, bf16 activations, f32 acc)."""
    h = x.reshape(x.shape[0], -1).astype(jnp.float32).astype(jnp.bfloat16)
    for layer in params[:-1]:
        y = jnp.dot(h, layer["w"], preferred_element_type=jnp.float32)
        mean = jnp.mean(y, axis=0, keepdims=True)
        centered = y - mean
        var = jnp.mean(centered * centered, axis=0, keepdims=True)
        scale = layer["gamma"] * jax.lax.rsqrt(var + BN_EPS)
        z = centered * scale + layer["beta"]
        h = jnp.maximum(z, LEAKY_SLOPE * z).astype(jnp.bfloat16)
    out = (jnp.dot(h, params[-1]["w"], preferred_element_type=jnp.float32)
           + params[-1]["b"])
    return out[:, :size_out]


def reference_forward_f32(x, raw_params):
    """Unpadded full-f32 reference of the original module semantics
    (train-mode BN batch stats, eval-mode dropout)."""
    h = x.reshape(x.shape[0], -1).astype(jnp.float32)
    for layer in raw_params[:-1]:
        y = h @ layer["w"] + layer["b"]
        mean = jnp.mean(y, axis=0, keepdims=True)
        var = jnp.mean((y - mean) ** 2, axis=0, keepdims=True)
        z = layer["gamma"] * (y - mean) / jnp.sqrt(var + BN_EPS) + layer["beta"]
        h = jnp.where(z >= 0.0, z, LEAKY_SLOPE * z)
    return h @ raw_params[-1]["w"] + raw_params[-1]["b"]


if __name__ == "__main__":
    key = jax.random.PRNGKey(0)
    key_x, key_p = jax.random.split(key)

    # Small synthetic problem: X of shape (8, 4, 4, 4) flattens to 64 = fc[0].
    batch = 8
    x = jax.random.normal(key_x, (batch, 4, 4, 4), jnp.float32)
    fc = [64, 32, 32]
    size_out = 10

    params, raw_params = init_params(key_p, fc, size_out)

    out = fully_connected_forward(x, params, size_out=size_out)
    out = jax.block_until_ready(out)
    assert out.shape == (batch, size_out), out.shape

    # Exact-math reference (same bf16/f32 mixed precision as the kernel).
    ref_kernel = reference_forward_kernel_math(x, params, size_out)
    assert jnp.allclose(out, ref_kernel, atol=1e-3, rtol=1e-3), \
        float(jnp.max(jnp.abs(out - ref_kernel)))

    # Loose sanity check against the full-f32 unpadded module math
    # (includes the hidden biases which BatchNorm cancels analytically).
    ref_f32 = reference_forward_f32(x, raw_params)
    assert jnp.allclose(out, ref_f32, atol=2e-1, rtol=2e-1), \
        float(jnp.max(jnp.abs(out - ref_f32)))

    print("KERNEL_OK")
</pallas_src>

<mosaic_0001>
module attributes {stable_mosaic.version = 11 : i64} {
  func.func @_mlp_kernel(%arg0: memref<8x64xf32, #tpu.memory_space<vmem>>, %arg1: memref<64x128xbf16, #tpu.memory_space<vmem>>, %arg2: memref<1x128xf32, #tpu.memory_space<vmem>>, %arg3: memref<1x128xf32, #tpu.memory_space<vmem>>, %arg4: memref<128x128xbf16, #tpu.memory_space<vmem>>, %arg5: memref<1x128xf32, #tpu.memory_space<vmem>>, %arg6: memref<1x128xf32, #tpu.memory_space<vmem>>, %arg7: memref<128x128xbf16, #tpu.memory_space<vmem>>, %arg8: memref<1x128xf32, #tpu.memory_space<vmem>>, %arg9: memref<8x128xf32, #tpu.memory_space<vmem>>) attributes {dimension_semantics = [], scalar_prefetch = 0 : i64, scratch_operands = 0 : i64, tpu.core_type = #tpu.core_type<tc>} {
    %c0 = arith.constant 0 : index
    %c0_0 = arith.constant 0 : index
    %0 = vector.load %arg0[%c0, %c0_0] : memref<8x64xf32, #tpu.memory_space<vmem>>, vector<8x64xf32>
    %1 = arith.truncf %0 : vector<8x64xf32> to vector<8x64xbf16>
    %c0_1 = arith.constant 0 : index
    %c0_2 = arith.constant 0 : index
    %2 = vector.load %arg1[%c0_1, %c0_2] : memref<64x128xbf16, #tpu.memory_space<vmem>>, vector<64x128xbf16>
    %cst = arith.constant dense<0.000000e+00> : vector<8x128xf32>
    %3 = tpu.matmul %1, %2, %cst {dimension_numbers = #tpu.dot_dimension_numbers<[1], [0], [0], [1], [0, 0, 1, 1], [], []>} : vector<8x64xbf16>, vector<64x128xbf16>, vector<8x128xf32> -> vector<8x128xf32>
    %cst_3 = arith.constant dense<0.000000e+00> : vector<128xf32>
    %4 = vector.multi_reduction <add>, %3, %cst_3 [0] : vector<8x128xf32> to vector<128xf32>
    %5 = vector.shape_cast %4 : vector<128xf32> to vector<1x128xf32>
    %cst_4 = arith.constant 8.000000e+00 : f32
    %6 = vector.broadcast %cst_4 : f32 to vector<1x128xf32>
    %7 = arith.divf %5, %6 : vector<1x128xf32>
    %8 = vector.broadcast %7 : vector<1x128xf32> to vector<8x128xf32>
    %9 = arith.subf %3, %8 : vector<8x128xf32>
    %10 = arith.mulf %9, %9 : vector<8x128xf32>
    %cst_5 = arith.constant dense<0.000000e+00> : vector<128xf32>
    %11 = vector.multi_reduction <add>, %10, %cst_5 [0] : vector<8x128xf32> to vector<128xf32>
    %12 = vector.shape_cast %11 : vector<128xf32> to vector<1x128xf32>
    %cst_6 = arith.constant 8.000000e+00 : f32
    %13 = vector.broadcast %cst_6 : f32 to vector<1x128xf32>
    %14 = arith.divf %12, %13 : vector<1x128xf32>
    %c0_7 = arith.constant 0 : index
    %c0_8 = arith.constant 0 : index
    %15 = vector.load %arg2[%c0_7, %c0_8] : memref<1x128xf32, #tpu.memory_space<vmem>>, vector<1x128xf32>
    %cst_9 = arith.constant 9.99999974E-6 : f32
    %16 = vector.broadcast %cst_9 : f32 to vector<1x128xf32>
    %17 = arith.addf %14, %16 : vector<1x128xf32>
    %18 = math.rsqrt %17 : vector<1x128xf32>
    %19 = arith.mulf %15, %18 : vector<1x128xf32>
    %20 = vector.broadcast %19 : vector<1x128xf32> to vector<8x128xf32>
    %21 = arith.mulf %9, %20 : vector<8x128xf32>
    %c0_10 = arith.constant 0 : index
    %c0_11 = arith.constant 0 : index
    %22 = vector.load %arg3[%c0_10, %c0_11] : memref<1x128xf32, #tpu.memory_space<vmem>>, vector<1x128xf32>
    %23 = vector.broadcast %22 : vector<1x128xf32> to vector<8x128xf32>
    %24 = arith.addf %21, %23 : vector<8x128xf32>
    %cst_12 = arith.constant 2.000000e-01 : f32
    %25 = vector.broadcast %cst_12 : f32 to vector<8x128xf32>
    %26 = arith.mulf %25, %24 : vector<8x128xf32>
    %27 = arith.maximumf %24, %26 : vector<8x128xf32>
    %28 = arith.truncf %27 : vector<8x128xf32> to vector<8x128xbf16>
    %c0_13 = arith.constant 0 : index
    %c0_14 = arith.constant 0 : index
    %29 = vector.load %arg4[%c0_13, %c0_14] : memref<128x128xbf16, #tpu.memory_space<vmem>>, vector<128x128xbf16>
    %cst_15 = arith.constant dense<0.000000e+00> : vector<8x128xf32>
    %30 = tpu.matmul %28, %29, %cst_15 {dimension_numbers = #tpu.dot_dimension_numbers<[1], [0], [0], [1], [0, 0, 1, 1], [], []>} : vector<8x128xbf16>, vector<128x128xbf16>, vector<8x128xf32> -> vector<8x128xf32>
    %cst_16 = arith.constant dense<0.000000e+00> : vector<128xf32>
    %31 = vector.multi_reduction <add>, %30, %cst_16 [0] : vector<8x128xf32> to vector<128xf32>
    %32 = vector.shape_cast %31 : vector<128xf32> to vector<1x128xf32>
    %cst_17 = arith.constant 8.000000e+00 : f32
    %33 = vector.broadcast %cst_17 : f32 to vector<1x128xf32>
    %34 = arith.divf %32, %33 : vector<1x128xf32>
    %35 = vector.broadcast %34 : vector<1x128xf32> to vector<8x128xf32>
    %36 = arith.subf %30, %35 : vector<8x128xf32>
    %37 = arith.mulf %36, %36 : vector<8x128xf32>
    %cst_18 = arith.constant dense<0.000000e+00> : vector<128xf32>
    %38 = vector.multi_reduction <add>, %37, %cst_18 [0] : vector<8x128xf32> to vector<128xf32>
    %39 = vector.shape_cast %38 : vector<128xf32> to vector<1x128xf32>
    %cst_19 = arith.constant 8.000000e+00 : f32
    %40 = vector.broadcast %cst_19 : f32 to vector<1x128xf32>
    %41 = arith.divf %39, %40 : vector<1x128xf32>
    %c0_20 = arith.constant 0 : index
    %c0_21 = arith.constant 0 : index
    %42 = vector.load %arg5[%c0_20, %c0_21] : memref<1x128xf32, #tpu.memory_space<vmem>>, vector<1x128xf32>
    %cst_22 = arith.constant 9.99999974E-6 : f32
    %43 = vector.broadcast %cst_22 : f32 to vector<1x128xf32>
    %44 = arith.addf %41, %43 : vector<1x128xf32>
    %45 = math.rsqrt %44 : vector<1x128xf32>
    %46 = arith.mulf %42, %45 : vector<1x128xf32>
    %47 = vector.broadcast %46 : vector<1x128xf32> to vector<8x128xf32>
    %48 = arith.mulf %36, %47 : vector<8x128xf32>
    %c0_23 = arith.constant 0 : index
    %c0_24 = arith.constant 0 : index
    %49 = vector.load %arg6[%c0_23, %c0_24] : memref<1x128xf32, #tpu.memory_space<vmem>>, vector<1x128xf32>
    %50 = vector.broadcast %49 : vector<1x128xf32> to vector<8x128xf32>
    %51 = arith.addf %48, %50 : vector<8x128xf32>
    %cst_25 = arith.constant 2.000000e-01 : f32
    %52 = vector.broadcast %cst_25 : f32 to vector<8x128xf32>
    %53 = arith.mulf %52, %51 : vector<8x128xf32>
    %54 = arith.maximumf %51, %53 : vector<8x128xf32>
    %55 = arith.truncf %54 : vector<8x128xf32> to vector<8x128xbf16>
    %c0_26 = arith.constant 0 : index
    %c0_27 = arith.constant 0 : index
    %56 = vector.load %arg7[%c0_26, %c0_27] : memref<128x128xbf16, #tpu.memory_space<vmem>>, vector<128x128xbf16>
    %cst_28 = arith.constant dense<0.000000e+00> : vector<8x128xf32>
    %57 = tpu.matmul %55, %56, %cst_28 {dimension_numbers = #tpu.dot_dimension_numbers<[1], [0], [0], [1], [0, 0, 1, 1], [], []>} : vector<8x128xbf16>, vector<128x128xbf16>, vector<8x128xf32> -> vector<8x128xf32>
    %c0_29 = arith.constant 0 : index
    %c0_30 = arith.constant 0 : index
    %58 = vector.load %arg8[%c0_29, %c0_30] : memref<1x128xf32, #tpu.memory_space<vmem>>, vector<1x128xf32>
    %59 = vector.broadcast %58 : vector<1x128xf32> to vector<8x128xf32>
    %60 = arith.addf %57, %59 : vector<8x128xf32>
    %c0_31 = arith.constant 0 : index
    %c0_32 = arith.constant 0 : index
    %61 = vector.load %arg9[%c0_31, %c0_32] : memref<8x128xf32, #tpu.memory_space<vmem>>, vector<8x128xf32>
    tpu.vector_store %arg9[%c0_31, %c0_32], %60 {strides = array<i32>} : memref<8x128xf32, #tpu.memory_space<vmem>>, vector<8x128xf32>,
    return
  }
}

</mosaic_0001>

<llo_original>
// kernel: fully_connected_forward.1
$region0: #{fully_connected_forward.1}
  #allocation0 [shape = 'u32[]', space=smem, size = 0x4, offset = 0x4, fixed_abs, tag = 'smem constant byte address 0x4 - core index']
  #allocation1 [shape = 'u32[72,128]{1,0:T(1,128)}', space=vmem, size = 0x9000, scoped, tag = 'internal scratch']
  %s0 = inlined_call_operand.vmem [shape: f32[8,64], index: 0, kind: input, shape index: {}]
  %s1 = inlined_call_operand.hbm [shape: bf16[64,128], index: 1, kind: input, shape index: {}]
  %s2 = inlined_call_operand.vmem [shape: f32[1,128], index: 2, kind: input, shape index: {}]
  %s3 = inlined_call_operand.vmem [shape: f32[1,128], index: 3, kind: input, shape index: {}]
  %s4 = inlined_call_operand.vmem [shape: bf16[128,128], index: 4, kind: input, shape index: {}]
  %s5 = inlined_call_operand.vmem [shape: f32[1,128], index: 5, kind: input, shape index: {}]
  %s6 = inlined_call_operand.vmem [shape: f32[1,128], index: 6, kind: input, shape index: {}]
  %s7 = inlined_call_operand.hbm [shape: bf16[128,128], index: 7, kind: input, shape index: {}]
  %s8 = inlined_call_operand.vmem [shape: f32[1,128], index: 8, kind: input, shape index: {}]
  %s9 = inlined_call_operand.hbm [shape: f32[8,128], index: 9, kind: output, shape index: {}]
  %s10 = sld [smem:[#allocation0]]
  $region54: #{fully_connected_forward.1} parent=0
    _
  %s12 = ssub.s32 1, %s10
  %s13 = scalar_select 0, %s12, %s10
  $region1: #{fully_connected_forward.1} parent=0
    #allocation2 [shape = 'u8[16384]{0}', space=vmem, size = 0x4000, scoped, tag = 'input window, operand 1, single buffered']
    #allocation3 [shape = 's32[1]{0}', space=sflag, size = 0x4, scoped, tag = 'scoped memory for fully_connected_forward.1']
    #allocation4 [shape = 's32[1]{0}', space=sflag, size = 0x4, scoped, tag = 'scoped memory for fully_connected_forward.1']
    #allocation5 [shape = 'u8[32768]{0}', space=vmem, size = 0x8000, scoped, tag = 'input window, operand 7, single buffered']
    #allocation6 [shape = 's32[1]{0}', space=sflag, size = 0x4, scoped, tag = 'scoped memory for fully_connected_forward.1']
    #allocation7 [shape = 'u8[4096]{0}', space=vmem, size = 0x1000, scoped, tag = 'output window, operand 0, single buffered']
    %14 = vsyncpa [#allocation3], 0
    %15 = vsyncpa [#allocation6], 0
    %16 = vsyncpa [#allocation4], 0
    // Predicated region
    $region2: #{fully_connected_forward.1} parent=1 // pred_check
      _
    $region3: #{fully_connected_forward.1} parent=1 // pred_check_branch
      %18 = sbr.rel (0) target = $region5
    $region4: #{fully_connected_forward.1} parent=1 // pred_region
      _
    $region5: #{fully_connected_forward.1} parent=1 // pred_fallthru
      _
    // Predicated region
    $region6: #{fully_connected_forward.1} parent=1 // pred_check
      _
    $region7: #{fully_connected_forward.1} parent=1 // pred_check_branch
      %20 = sbr.rel (0) target = $region9
    $region8: #{fully_connected_forward.1} parent=1 // pred_region
      %22 = vsyncadd [#allocation3], 0
      %s23 = sshll.u32 %s1, 4
      %s24 = int_to_ptr.hbm [resolvable:$true] %s23
      %s25 = sshll.u32 [#allocation2], 4
      %s26 = int_to_ptr.vmem [resolvable:$true] %s25
      %31 = dma.hbm_to_vmem [thread:$0]  %s24, 512, %s26, [#allocation3], 64, 64, 4
    $region9: #{fully_connected_forward.1} parent=1 // pred_fallthru
      _
    // Predicated region
    $region10: #{fully_connected_forward.1} parent=1 // pred_check
      _
    $region11: #{fully_connected_forward.1} parent=1 // pred_check_branch
      %33 = sbr.rel (0) target = $region13
    $region12: #{fully_connected_forward.1} parent=1 // pred_region
      _
    $region13: #{fully_connected_forward.1} parent=1 // pred_fallthru
      _
    // Predicated region
    $region14: #{fully_connected_forward.1} parent=1 // pred_check
      _
    $region15: #{fully_connected_forward.1} parent=1 // pred_check_branch
      %35 = sbr.rel (0) target = $region17
    $region16: #{fully_connected_forward.1} parent=1 // pred_region
      _
    $region17: #{fully_connected_forward.1} parent=1 // pred_fallthru
      _
    // Predicated region
    $region18: #{fully_connected_forward.1} parent=1 // pred_check
      _
    $region19: #{fully_connected_forward.1} parent=1 // pred_check_branch
      %37 = sbr.rel (0) target = $region21
    $region20: #{fully_connected_forward.1} parent=1 // pred_region
      _
    $region21: #{fully_connected_forward.1} parent=1 // pred_fallthru
      _
    // Predicated region
    $region22: #{fully_connected_forward.1} parent=1 // pred_check
      _
    $region23: #{fully_connected_forward.1} parent=1 // pred_check_branch
      %39 = sbr.rel (0) target = $region25
    $region24: #{fully_connected_forward.1} parent=1 // pred_region
      _
    $region25: #{fully_connected_forward.1} parent=1 // pred_fallthru
      _
    // Predicated region
    $region26: #{fully_connected_forward.1} parent=1 // pred_check
      _
    $region27: #{fully_connected_forward.1} parent=1 // pred_check_branch
      %41 = sbr.rel (0) target = $region29
    $region28: #{fully_connected_forward.1} parent=1 // pred_region
      _
    $region29: #{fully_connected_forward.1} parent=1 // pred_fallthru
      _
    // Predicated region
    $region30: #{fully_connected_forward.1} parent=1 // pred_check
      _
    $region31: #{fully_connected_forward.1} parent=1 // pred_check_branch
      %43 = sbr.rel (0) target = $region33
    $region32: #{fully_connected_forward.1} parent=1 // pred_region
      %45 = vsyncadd [#allocation6], 0
      %s46 = sshll.u32 %s7, 4
      %s47 = int_to_ptr.hbm [resolvable:$true] %s46
      %s48 = sshll.u32 [#allocation5], 4
      %s49 = int_to_ptr.vmem [resolvable:$true] %s48
      %54 = dma.hbm_to_vmem [thread:$0]  %s47, 1024, %s49, [#allocation6], 64, 64, 4
    $region33: #{fully_connected_forward.1} parent=1 // pred_fallthru
      _
    // Predicated region
    $region34: #{fully_connected_forward.1} parent=1 // pred_check
      _
    $region35: #{fully_connected_forward.1} parent=1 // pred_check_branch
      %56 = sbr.rel (0) target = $region37
    $region36: #{fully_connected_forward.1} parent=1 // pred_region
      _
    $region37: #{fully_connected_forward.1} parent=1 // pred_fallthru
      _
    // Predicated region
    $region38: #{fully_connected_forward.1} parent=1 // pred_check
      _
    $region39: #{fully_connected_forward.1} parent=1 // pred_check_branch
      %58 = sbr.rel (0) target = $region41
    $region40: #{fully_connected_forward.1} parent=1 // pred_region
      %60 = dma.done [#allocation3], 512
    $region41: #{fully_connected_forward.1} parent=1 // pred_fallthru
      _
    // Predicated region
    $region42: #{fully_connected_forward.1} parent=1 // pred_check
      _
    $region43: #{fully_connected_forward.1} parent=1 // pred_check_branch
      %62 = sbr.rel (0) target = $region45
    $region44: #{fully_connected_forward.1} parent=1 // pred_region
      %64 = dma.done [#allocation6], 1024
    $region45: #{fully_connected_forward.1} parent=1 // pred_fallthru
      _
    %v66 = vld [vmem:[%s0] sm:$0xff]
    %v67 = vpack.c.bf16 %v66, %v66
    %v68 = vld [vmem:[#allocation2] sm:$0xf]
    %v69 = vld [vmem:[#allocation2 + $0x4] sm:$0xf]
    %v70 = vld [vmem:[#allocation2 + $0x8] sm:$0xf]
    %v71 = vld [vmem:[#allocation2 + $0xc] sm:$0xf]
    %v72 = vld [vmem:[#allocation2 + $0x10] sm:$0xf]
    %v73 = vld [vmem:[#allocation2 + $0x14] sm:$0xf]
    %v74 = vld [vmem:[#allocation2 + $0x18] sm:$0xf]
    %v75 = vld [vmem:[#allocation2 + $0x1c] sm:$0xf]
    %v84 = vunpack.c.l.b16 %v68
    %v85 = vunpack.c.l.b16 %v69
    %v86 = vunpack.c.l.b16 %v70
    %v87 = vunpack.c.l.b16 %v71
    %v88 = vunpack.c.l.b16 %v72
    %v89 = vunpack.c.l.b16 %v73
    %v90 = vunpack.c.l.b16 %v74
    %v91 = vunpack.c.l.b16 %v75
    %v92 = vpack.c.b16 %v85, %v84
    %v93 = vpack.c.b16 %v87, %v86
    %v94 = vpack.c.b16 %v89, %v88
    %v95 = vpack.c.b16 %v91, %v90
    %vm100 = vcmask 523264
    %v102 = vsel %vm100, %v67, 0
    %104 = vmatpush.bf16.msra.mxu0 0
    %105 = vmatpush.bf16.msra.mxu0 0
    %106 = vmatpush.bf16.msra.mxu0 0
    %107 = vmatpush.bf16.msra.mxu0 0
    %108 = vmatpush.bf16.msra.mxu0 %v95
    %109 = vmatpush.bf16.msra.mxu0 %v94
    %110 = vmatpush.bf16.msra.mxu0 %v93
    %111 = vmatpush.bf16.msra.mxu0 %v92
    %112 = vmatmul.bf16.gmra.mxu0 %v102
    %v113 = vpop.f32.mrf.mxu0
    %v114 = vadd.f32 0.0, %v113
    %v115 = vpop.f32.mrf.mxu0
    %116 = vdwg.mxu0
    %v117 = vrot.slane %v114, 4
    %v118 = vadd.f32 %v114, %v117
    %v119 = vrot.slane %v118, 2
    %v120 = vadd.f32 %v118, %v119
    %v121 = vrot.slane %v120, 1
    %v122 = vadd.f32 %v120, %v121
    %v123 = vrcp.pop 8.0
    %v124 = vmul.f32 8.0, %v123
    %v125 = vsub.f32 1.0, %v124
    %v126 = vmul.f32 %v123, %v125
    %v127 = vadd.f32 %v123, %v126
    %vm128 = vweird.f32 %v123
    %v129 = vsel %vm128, %v123, %v127
    %v130 = vmul.f32 %v122, %v129
    %v131 = vsub.f32 %v114, %v130
    %v132 = vmul.f32 %v131, %v131
    %v133 = vrot.slane %v132, 4
    %v134 = vadd.f32 %v132, %v133
    %v135 = vrot.slane %v134, 2
    %v136 = vadd.f32 %v134, %v135
    %v137 = vrot.slane %v136, 1
    %v138 = vadd.f32 %v136, %v137
    %v139 = vmul.f32 %v138, %v129
    %v140 = vld [vmem:[%s2] sm:$0x1]
    %v141 = vadd.f32 %v139, 1e-05
    %v142 = vrsqrt.pop %v141
    %v143 = vmul.f32 %v142, %v141
    %v144 = vmul.f32 %v143, %v142
    %v145 = vmul.f32 0.5, %v144
    %v146 = vsub.f32 1.5, %v145
    %v147 = vmul.f32 %v142, %v146
    %vm148 = vweird.f32 %v141
    %vm149 = vweird.f32 %v142
    %vm150 = vmor %vm148, %vm149
    %v151 = vsel %vm150, %v142, %v147
    %v152 = vmul.f32 %v140, %v151
    %v154 = vperm.slane %v152, 0
    %v156 = vmul.f32 %v131, %v154
    %v157 = vld [vmem:[%s3] sm:$0x1]
    %v159 = vperm.slane %v157, 0
    %v161 = vadd.f32 %v156, %v159
    %v162 = vmul.f32 %v161, 0.2
    %v163 = vmax.f32 %v161, %v162
    %v164 = vpack.c.bf16 %v163, %v163
    %v165 = vld [vmem:[%s4] sm:$0xf]
    %v166 = vld [vmem:[%s4 + $0x4] sm:$0xf]
    %v167 = vld [vmem:[%s4 + $0x8] sm:$0xf]
    %v168 = vld [vmem:[%s4 + $0xc] sm:$0xf]
    %v169 = vld [vmem:[%s4 + $0x10] sm:$0xf]
    %v170 = vld [vmem:[%s4 + $0x14] sm:$0xf]
    %v171 = vld [vmem:[%s4 + $0x18] sm:$0xf]
    %v172 = vld [vmem:[%s4 + $0x1c] sm:$0xf]
    %v173 = vld [vmem:[%s4 + $0x20] sm:$0xf]
    %v174 = vld [vmem:[%s4 + $0x24] sm:$0xf]
    %v175 = vld [vmem:[%s4 + $0x28] sm:$0xf]
    %v176 = vld [vmem:[%s4 + $0x2c] sm:$0xf]
    %v177 = vld [vmem:[%s4 + $0x30] sm:$0xf]
    %v178 = vld [vmem:[%s4 + $0x34] sm:$0xf]
    %v179 = vld [vmem:[%s4 + $0x38] sm:$0xf]
    %v180 = vld [vmem:[%s4 + $0x3c] sm:$0xf]
    %v197 = vunpack.c.l.b16 %v165
    %v198 = vunpack.c.l.b16 %v166
    %v199 = vunpack.c.l.b16 %v167
    %v200 = vunpack.c.l.b16 %v168
    %v201 = vunpack.c.l.b16 %v169
    %v202 = vunpack.c.l.b16 %v170
    %v203 = vunpack.c.l.b16 %v171
    %v204 = vunpack.c.l.b16 %v172
    %v205 = vunpack.c.l.b16 %v173
    %v206 = vunpack.c.l.b16 %v174
    %v207 = vunpack.c.l.b16 %v175
    %v208 = vunpack.c.l.b16 %v176
    %v209 = vunpack.c.l.b16 %v177
    %v210 = vunpack.c.l.b16 %v178
    %v211 = vunpack.c.l.b16 %v179
    %v212 = vunpack.c.l.b16 %v180
    %v213 = vpack.c.b16 %v198, %v197
    %v214 = vpack.c.b16 %v200, %v199
    %v215 = vpack.c.b16 %v202, %v201
    %v216 = vpack.c.b16 %v204, %v203
    %v217 = vpack.c.b16 %v206, %v205
    %v218 = vpack.c.b16 %v208, %v207
    %v219 = vpack.c.b16 %v210, %v209
    %v220 = vpack.c.b16 %v212, %v211
    %229 = vmatpush.bf16.msra.mxu0 %v220
    %230 = vmatpush.bf16.msra.mxu0 %v219
    %231 = vmatpush.bf16.msra.mxu0 %v218
    %232 = vmatpush.bf16.msra.mxu0 %v217
    %233 = vmatpush.bf16.msra.mxu0 %v216
    %234 = vmatpush.bf16.msra.mxu0 %v215
    %235 = vmatpush.bf16.msra.mxu0 %v214
    %236 = vmatpush.bf16.msra.mxu0 %v213
    %237 = vmatmul.bf16.gmra.mxu0 %v164
    %v238 = vpop.f32.mrf.mxu0
    %v239 = vadd.f32 0.0, %v238
    %v240 = vpop.f32.mrf.mxu0
    %241 = vdwg.mxu0
    %v242 = vrot.slane %v239, 4
    %v243 = vadd.f32 %v239, %v242
    %v244 = vrot.slane %v243, 2
    %v245 = vadd.f32 %v243, %v244
    %v246 = vrot.slane %v245, 1
    %v247 = vadd.f32 %v245, %v246
    %v248 = vmul.f32 %v247, %v129
    %v249 = vsub.f32 %v239, %v248
    %v250 = vmul.f32 %v249, %v249
    %v251 = vrot.slane %v250, 4
    %v252 = vadd.f32 %v250, %v251
    %v253 = vrot.slane %v252, 2
    %v254 = vadd.f32 %v252, %v253
    %v255 = vrot.slane %v254, 1
    %v256 = vadd.f32 %v254, %v255
    %v257 = vmul.f32 %v256, %v129
    %v258 = vld [vmem:[%s5] sm:$0x1]
    %v259 = vadd.f32 %v257, 1e-05
    %v260 = vrsqrt.pop %v259
    %v261 = vmul.f32 %v260, %v259
    %v262 = vmul.f32 %v261, %v260
    %v263 = vmul.f32 0.5, %v262
    %v264 = vsub.f32 1.5, %v263
    %v265 = vmul.f32 %v260, %v264
    %vm266 = vweird.f32 %v259
    %vm267 = vweird.f32 %v260
    %vm268 = vmor %vm266, %vm267
    %v269 = vsel %vm268, %v260, %v265
    %v270 = vmul.f32 %v258, %v269
    %v272 = vperm.slane %v270, 0
    %v274 = vmul.f32 %v249, %v272
    %v275 = vld [vmem:[%s6] sm:$0x1]
    %v277 = vperm.slane %v275, 0
    %v279 = vadd.f32 %v274, %v277
    %v280 = vmul.f32 %v279, 0.2
    %v281 = vmax.f32 %v279, %v280
    %v282 = vpack.c.bf16 %v281, %v281
    %v283 = vld [vmem:[#allocation5] sm:$0xf]
    %v284 = vld [vmem:[#allocation5 + $0x4] sm:$0xf]
    %v285 = vld [vmem:[#allocation5 + $0x8] sm:$0xf]
    %v286 = vld [vmem:[#allocation5 + $0xc] sm:$0xf]
    %v287 = vld [vmem:[#allocation5 + $0x10] sm:$0xf]
    %v288 = vld [vmem:[#allocation5 + $0x14] sm:$0xf]
    %v289 = vld [vmem:[#allocation5 + $0x18] sm:$0xf]
    %v290 = vld [vmem:[#allocation5 + $0x1c] sm:$0xf]
    %v291 = vld [vmem:[#allocation5 + $0x20] sm:$0xf]
    %v292 = vld [vmem:[#allocation5 + $0x24] sm:$0xf]
    %v293 = vld [vmem:[#allocation5 + $0x28] sm:$0xf]
    %v294 = vld [vmem:[#allocation5 + $0x2c] sm:$0xf]
    %v295 = vld [vmem:[#allocation5 + $0x30] sm:$0xf]
    %v296 = vld [vmem:[#allocation5 + $0x34] sm:$0xf]
    %v297 = vld [vmem:[#allocation5 + $0x38] sm:$0xf]
    %v298 = vld [vmem:[#allocation5 + $0x3c] sm:$0xf]
    %v299 = vld [vmem:[%s8] sm:$0x1]
    %v301 = vperm.slane %v299, 0
    %v319 = vunpack.c.l.b16 %v283
    %v320 = vunpack.c.l.b16 %v284
    %v321 = vunpack.c.l.b16 %v285
    %v322 = vunpack.c.l.b16 %v286
    %v323 = vunpack.c.l.b16 %v287
    %v324 = vunpack.c.l.b16 %v288
    %v325 = vunpack.c.l.b16 %v289
    %v326 = vunpack.c.l.b16 %v290
    %v327 = vunpack.c.l.b16 %v291
    %v328 = vunpack.c.l.b16 %v292
    %v329 = vunpack.c.l.b16 %v293
    %v330 = vunpack.c.l.b16 %v294
    %v331 = vunpack.c.l.b16 %v295
    %v332 = vunpack.c.l.b16 %v296
    %v333 = vunpack.c.l.b16 %v297
    %v334 = vunpack.c.l.b16 %v298
    %v335 = vpack.c.b16 %v320, %v319
    %v336 = vpack.c.b16 %v322, %v321
    %v337 = vpack.c.b16 %v324, %v323
    %v338 = vpack.c.b16 %v326, %v325
    %v339 = vpack.c.b16 %v328, %v327
    %v340 = vpack.c.b16 %v330, %v329
    %v341 = vpack.c.b16 %v332, %v331
    %v342 = vpack.c.b16 %v334, %v333
    %351 = vmatpush.bf16.msra.mxu0 %v342
    %352 = vmatpush.bf16.msra.mxu0 %v341
    %353 = vmatpush.bf16.msra.mxu0 %v340
    %354 = vmatpush.bf16.msra.mxu0 %v339
    %355 = vmatpush.bf16.msra.mxu0 %v338
    %356 = vmatpush.bf16.msra.mxu0 %v337
    %357 = vmatpush.bf16.msra.mxu0 %v336
    %358 = vmatpush.bf16.msra.mxu0 %v335
    %359 = vmatmul.bf16.gmra.mxu0 %v282
    %v360 = vpop.f32.mrf.mxu0
    %v361 = vadd.f32 %v301, %v360
    %v362 = vpop.f32.mrf.mxu0
    %363 = vdwg.mxu0
    %364 = vst [vmem:[#allocation7] sm:$0xff] %v361
    // Predicated region
    $region46: #{fully_connected_forward.1} parent=1 // pred_check
      _
    $region47: #{fully_connected_forward.1} parent=1 // pred_check_branch
      %366 = sbr.rel (0) target = $region49
    $region48: #{fully_connected_forward.1} parent=1 // pred_region
      %368 = vsyncadd [#allocation4], 0
      %s370 = sshll.u32 [#allocation7], 4
      %s371 = int_to_ptr.vmem [resolvable:$true] %s370
      %s372 = sshll.u32 %s9, 4
      %s373 = int_to_ptr.hbm [resolvable:$true] %s372
      %375 = dma.vmem_to_hbm [thread:$0]  %s371, 128, %s373, [#allocation4]
    $region49: #{fully_connected_forward.1} parent=1 // pred_fallthru
      _
    // Predicated region
    $region50: #{fully_connected_forward.1} parent=1 // pred_check
      _
    $region51: #{fully_connected_forward.1} parent=1 // pred_check_branch
      %377 = sbr.rel (0) target = $region53
    $region52: #{fully_connected_forward.1} parent=1 // pred_region
      %379 = dma.done [#allocation4], 128
    $region53: #{fully_connected_forward.1} parent=1 // pred_fallthru
      _
    %380 = vsyncpa [#allocation3], 1
    %381 = vsyncpa [#allocation6], 1
    %382 = vsyncpa [#allocation4], 1

</llo_original>
